<compile_context>
chip_gen: v5e
topology: v5e:2x2
jax: 0.10.0
libtpu: 0.0.40
codegen_flags: <defaults>
</compile_context>

<pallas_src>
import math

import numpy as np
import jax
import jax.numpy as jnp
from jax.experimental import pallas as pl
from jax.experimental.pallas import tpu as pltpu

# Model hyper-parameters (small, consistent with the module's forward)
DIM = 32
PFFN_DIM = 64
HEADS = 4
SEQ_LEN = 8
BATCH = 2
HEAD_DIM = DIM // HEADS
LN_EPS = 1e-5

# ---- packed weight-slab layout (rows x 128 lanes, every section 8-row aligned) ----
LANES = 128
N_ROWS = SEQ_LEN * BATCH                 # flattened rows (s*B + b)
QKV_OFF = 0                              # 32 rows, lanes [0:96] = fused [Q|K|V] weights
WOUT_OFF = QKV_OFF + DIM                 # 32 rows, lanes [0:32] = merged out-proj
W1_OFF = WOUT_OFF + DIM                  # 32 rows, lanes [0:64] = FFN W1
W2_OFF = W1_OFF + DIM                    # 64 rows, lanes [0:32] = FFN W2
VEC_OFF = W2_OFF + PFFN_DIM              # 8 rows: b_qkv,out_b,ln1_w,ln1_b,b1,b2,ln2_w,ln2_b
MASK_OFF = VEC_OFF + 8                   # 16 rows, lanes [0:16] = additive per-sample mask
SLAB_ROWS = MASK_OFF + N_ROWS            # 184


def _layernorm(x, w, b):
    mu = jnp.mean(x, axis=-1, keepdims=True)
    var = jnp.mean((x - mu) ** 2, axis=-1, keepdims=True)
    return (x - mu) * jax.lax.rsqrt(var + LN_EPS) * w + b


def self_attn_channel_kernel(x_ref, w_ref, o_ref):
    """Fused transformer block, single invocation over all S*B rows.

    x_ref : (N, D)            rows ordered (s, b) -> s*B + b
    w_ref : (SLAB_ROWS, 128)  packed weights / biases / mask (layout above)
    """
    N, D = x_ref.shape
    H, Dh, P = HEADS, HEAD_DIM, PFFN_DIM
    HD = H * Dh

    x = x_ref[...].astype(jnp.float32)                                   # (N, D)

    # ---- fused QKV projection: ONE (N,D)x(D,128) MXU matmul ----------------
    # lanes: [0:32]=Q (scale folded), [32:64]=K, [64:96]=V, [96:128]=pad
    qkv = jnp.dot(x, w_ref[QKV_OFF:QKV_OFF + D, :],
                  preferred_element_type=jnp.float32) + w_ref[VEC_OFF:VEC_OFF + 1, :]

    # per-sample additive mask (0 / -1e30), precomputed at pack time
    mask = w_ref[MASK_OFF:MASK_OFF + N, 0:N]                             # (N, N)

    # ---- per-head attention (static unroll; independent chains interleave) -
    o_heads = []
    for h in range(H):
        q_h = qkv[:, h * Dh:(h + 1) * Dh]                                # (N, Dh)
        k_h = qkv[:, HD + h * Dh:HD + (h + 1) * Dh]
        v_h = qkv[:, 2 * HD + h * Dh:2 * HD + (h + 1) * Dh]
        s_h = jnp.einsum("qd,kd->qk", q_h, k_h,
                         preferred_element_type=jnp.float32) + mask      # (N, N)
        m = jnp.max(s_h, axis=-1, keepdims=True)
        e = jnp.exp(s_h - m)
        p_h = e / jnp.sum(e, axis=-1, keepdims=True)                     # exact normalize
        o_heads.append(jnp.dot(p_h, v_h, preferred_element_type=jnp.float32))

    # ---- head merge (lane concat) + single out-projection matmul -----------
    o_merged = jnp.concatenate(o_heads, axis=-1)                         # (N, D)
    attn = jnp.dot(o_merged, w_ref[WOUT_OFF:WOUT_OFF + D, 0:D],
                   preferred_element_type=jnp.float32) + w_ref[VEC_OFF + 1:VEC_OFF + 2, 0:D]

    # ---- add & norm ---------------------------------------------------------
    x1 = _layernorm(x + attn, w_ref[VEC_OFF + 2:VEC_OFF + 3, 0:D],
                    w_ref[VEC_OFF + 3:VEC_OFF + 4, 0:D])

    # ---- position-wise FFN: Linear -> ReLU -> Linear ------------------------
    h1 = jnp.maximum(
        jnp.dot(x1, w_ref[W1_OFF:W1_OFF + D, 0:P], preferred_element_type=jnp.float32)
        + w_ref[VEC_OFF + 4:VEC_OFF + 5, 0:P], 0.0)                      # (N, P)
    ffn = jnp.dot(h1, w_ref[W2_OFF:W2_OFF + P, 0:D],
                  preferred_element_type=jnp.float32) + w_ref[VEC_OFF + 5:VEC_OFF + 6, 0:D]

    # ---- add & norm ---------------------------------------------------------
    x2 = _layernorm(x1 + ffn, w_ref[VEC_OFF + 6:VEC_OFF + 7, 0:D],
                    w_ref[VEC_OFF + 7:VEC_OFF + 8, 0:D])
    o_ref[...] = x2.astype(o_ref.dtype)


def init_params(key):
    """Deterministic, PyTorch-shaped parameters (Linear weights are (out, in))."""
    ks = jax.random.split(key, 16)
    n = lambda k, shp, s=0.05: (jax.random.normal(k, shp, jnp.float32) * s)
    D, P = DIM, PFFN_DIM
    return dict(
        wq=n(ks[0], (D, D)), bq=n(ks[1], (D,)),
        wk=n(ks[2], (D, D)), bk=n(ks[3], (D,)),
        wv=n(ks[4], (D, D)), bv=n(ks[5], (D,)),
        in_proj_w=n(ks[6], (3 * D, D)), in_proj_b=n(ks[7], (3 * D,)),
        out_w=n(ks[8], (D, D)), out_b=n(ks[9], (D,)),
        ln1_w=jnp.ones((D,), jnp.float32), ln1_b=jnp.zeros((D,), jnp.float32),
        w1=n(ks[10], (P, D)), b1=n(ks[11], (P,)),
        w2=n(ks[12], (D, P)), b2=n(ks[13], (D,)),
        ln2_w=jnp.ones((D,), jnp.float32), ln2_b=jnp.zeros((D,), jnp.float32),
    )


def pack_params(p):
    """One-time packing: fold projection chains, build the single (184,128) slab.

    Called ONCE per parameter set (hoisted out of the jitted forward path).
    """
    D, P, Dh = DIM, PFFN_DIM, HEAD_DIM
    N = SEQ_LEN * BATCH
    in_w, in_b = p["in_proj_w"], p["in_proj_b"]
    scale = 1.0 / math.sqrt(Dh)

    def fused(w, b, iw, ib, s=1.0):
        # Linear(dim,dim) followed by the MHA in_proj slice, composed exactly:
        #   (x @ w.T + b) @ iw.T + ib  ==  x @ (w.T @ iw.T) + (b @ iw.T + ib)
        return (w.T @ iw.T) * s, (b @ iw.T + ib) * s            # (D,D) in->out, (D,)

    Wq, bq = fused(p["wq"], p["bq"], in_w[:D], in_b[:D], scale)  # scale folded into Q
    Wk, bk = fused(p["wk"], p["bk"], in_w[D:2 * D], in_b[D:2 * D])
    Wv, bv = fused(p["wv"], p["bv"], in_w[2 * D:], in_b[2 * D:])

    z = lambda r, c: jnp.zeros((r, c), jnp.float32)
    w_qkv = jnp.concatenate([Wq, Wk, Wv, z(D, LANES - 3 * D)], axis=1)   # (32, 128)
    w_out = jnp.concatenate([p["out_w"].T, z(D, LANES - D)], axis=1)     # (32, 128)
    w1 = jnp.concatenate([p["w1"].T, z(D, LANES - P)], axis=1)           # (32, 128)
    w2 = jnp.concatenate([p["w2"].T, z(P, LANES - D)], axis=1)           # (64, 128)

    def vrow(v):
        v = jnp.asarray(v, jnp.float32)
        return jnp.concatenate([v, jnp.zeros((LANES - v.shape[0],), jnp.float32)])[None, :]

    vec = jnp.concatenate([
        vrow(jnp.concatenate([bq, bk, bv])),      # fused QKV bias
        vrow(p["out_b"]), vrow(p["ln1_w"]), vrow(p["ln1_b"]),
        vrow(p["b1"]), vrow(p["b2"]), vrow(p["ln2_w"]), vrow(p["ln2_b"]),
    ], axis=0)                                                            # (8, 128)

    # per-sample additive block mask; rows flattened as s*B + b -> same sample iff i%B == j%B
    idx = np.arange(N)
    same = (idx[:, None] % BATCH) == (idx[None, :] % BATCH)
    mask = np.where(same, 0.0, -1e30).astype(np.float32)
    mask = np.pad(mask, ((0, 0), (0, LANES - N)))                         # (16, 128)

    slab = jnp.concatenate([w_qkv, w_out, w1, w2, vec, jnp.asarray(mask)], axis=0)
    assert slab.shape == (SLAB_ROWS, LANES)
    return slab


@jax.jit
def self_attn_channel_forward(x_sbd, w_slab):
    """x_sbd: (S, B, D) — PyTorch layout. w_slab: pre-packed (184, 128). Returns (S, B, D)."""
    S, B, D = x_sbd.shape
    N = S * B
    xf = x_sbd.reshape(N, D)                                              # rows ordered s*B + b
    out = pl.pallas_call(
        self_attn_channel_kernel,
        out_shape=jax.ShapeDtypeStruct((N, D), x_sbd.dtype),
        grid=(1,),                                                        # single invocation
        in_specs=[
            pl.BlockSpec((N, D), lambda i: (0, 0)),
            pl.BlockSpec((SLAB_ROWS, LANES), lambda i: (0, 0)),
        ],
        out_specs=pl.BlockSpec((N, D), lambda i: (0, 0)),
        compiler_params=pltpu.CompilerParams(dimension_semantics=("arbitrary",)),
    )(xf, w_slab)
    return out.reshape(S, B, D)


def reference_forward(x, p):
    """Pure-JAX mirror of the PyTorch forward, for validation."""
    S, B, D = x.shape
    H, Dh = HEADS, HEAD_DIM
    q = x @ p["wq"].T + p["bq"]
    k = x @ p["wk"].T + p["bk"]
    v = x @ p["wv"].T + p["bv"]
    in_w, in_b = p["in_proj_w"], p["in_proj_b"]
    q = q @ in_w[:D].T + in_b[:D]
    k = k @ in_w[D:2 * D].T + in_b[D:2 * D]
    v = v @ in_w[2 * D:].T + in_b[2 * D:]
    split = lambda t: jnp.transpose(t.reshape(S, B, H, Dh), (1, 2, 0, 3))
    qh, kh, vh = split(q), split(k), split(v)
    s = jnp.einsum("bhsd,bhtd->bhst", qh, kh) / math.sqrt(Dh)
    pr = jax.nn.softmax(s, axis=-1)
    o = jnp.einsum("bhst,bhtd->bhsd", pr, vh)
    o = jnp.transpose(o, (2, 0, 1, 3)).reshape(S, B, D)
    o = o @ p["out_w"].T + p["out_b"]
    x1 = _layernorm(x + o, p["ln1_w"], p["ln1_b"])
    h1 = jax.nn.relu(x1 @ p["w1"].T + p["b1"])
    ffn = h1 @ p["w2"].T + p["b2"]
    return _layernorm(x1 + ffn, p["ln2_w"], p["ln2_b"])


if __name__ == "__main__":
    key = jax.random.PRNGKey(0)
    kx, kp = jax.random.split(key)
    x = jax.random.normal(kx, (SEQ_LEN, BATCH, DIM), jnp.float32)   # (S, B, D)
    params = init_params(kp)

    w_slab = pack_params(params)            # packed once, reused for every forward call

    out = jax.block_until_ready(self_attn_channel_forward(x, w_slab))
    ref = jax.block_until_ready(reference_forward(x, params))

    assert out.shape == x.shape
    err = float(jnp.max(jnp.abs(out - ref)))
    assert jnp.allclose(out, ref, atol=1e-4, rtol=1e-4), f"max err {err}"
    print("KERNEL_OK")
</pallas_src>

<mosaic_0001>
module attributes {stable_mosaic.version = 11 : i64} {
  func.func @self_attn_channel_kernel(%arg0: i32, %arg1: memref<16x32xf32, #tpu.memory_space<vmem>>, %arg2: memref<184x128xf32, #tpu.memory_space<vmem>>, %arg3: memref<16x32xf32, #tpu.memory_space<vmem>>) attributes {dimension_semantics = [#tpu.dimension_semantics<arbitrary>], iteration_bounds = array<i64: 1>, scalar_prefetch = 0 : i64, scratch_operands = 0 : i64, tpu.core_type = #tpu.core_type<tc>, window_params = [{pipeline_mode = #tpu.pipeline_mode<synchronous>, transform_indices = @transform_0, window_bounds = array<i64: 16, 32>}, {pipeline_mode = #tpu.pipeline_mode<synchronous>, transform_indices = @transform_1, window_bounds = array<i64: 184, 128>}, {pipeline_mode = #tpu.pipeline_mode<synchronous>, transform_indices = @transform_2, window_bounds = array<i64: 16, 32>}]} {
    %c0 = arith.constant 0 : index
    %c0_0 = arith.constant 0 : index
    %0 = vector.load %arg1[%c0, %c0_0] : memref<16x32xf32, #tpu.memory_space<vmem>>, vector<16x32xf32>
    %c0_1 = arith.constant 0 : index
    %c0_2 = arith.constant 0 : index
    %1 = vector.load %arg2[%c0_1, %c0_2] : memref<184x128xf32, #tpu.memory_space<vmem>>, vector<32x128xf32>
    %cst = arith.constant dense<0.000000e+00> : vector<16x128xf32>
    %2 = tpu.matmul %0, %1, %cst {dimension_numbers = #tpu.dot_dimension_numbers<[1], [0], [0], [1], [0, 0, 1, 1], [], []>} : vector<16x32xf32>, vector<32x128xf32>, vector<16x128xf32> -> vector<16x128xf32>
    %c160 = arith.constant 160 : index
    %c0_3 = arith.constant 0 : index
    %3 = vector.load %arg2[%c160, %c0_3] : memref<184x128xf32, #tpu.memory_space<vmem>>, vector<1x128xf32>
    %4 = vector.broadcast %3 : vector<1x128xf32> to vector<16x128xf32>
    %5 = arith.addf %2, %4 : vector<16x128xf32>
    %c168 = arith.constant 168 : index
    %c0_4 = arith.constant 0 : index
    %6 = vector.load %arg2[%c168, %c0_4] : memref<184x128xf32, #tpu.memory_space<vmem>>, vector<16x16xf32>
    %7 = vector.extract_strided_slice %5 {offsets = [0, 0], sizes = [16, 8], strides = [1, 1]} : vector<16x128xf32> to vector<16x8xf32>
    %8 = vector.extract_strided_slice %5 {offsets = [0, 32], sizes = [16, 8], strides = [1, 1]} : vector<16x128xf32> to vector<16x8xf32>
    %9 = vector.extract_strided_slice %5 {offsets = [0, 64], sizes = [16, 8], strides = [1, 1]} : vector<16x128xf32> to vector<16x8xf32>
    "tpu.trace_start"() <{level = 10 : i32, message = "qd,kd->qk"}> : () -> ()
    %cst_5 = arith.constant dense<0.000000e+00> : vector<16x16xf32>
    %10 = tpu.matmul %7, %8, %cst_5 {dimension_numbers = #tpu.dot_dimension_numbers<[1], [1], [0], [0], [0, 0, 1, 0], [], []>} : vector<16x8xf32>, vector<16x8xf32>, vector<16x16xf32> -> vector<16x16xf32>
    "tpu.trace_stop"() : () -> ()
    %11 = arith.addf %10, %6 : vector<16x16xf32>
    %cst_6 = arith.constant dense<0xFF800000> : vector<16xf32>
    %12 = vector.multi_reduction <maximumf>, %11, %cst_6 [1] : vector<16x16xf32> to vector<16xf32>
    %13 = vector.shape_cast %12 : vector<16xf32> to vector<16x1xf32>
    %14 = vector.broadcast %13 : vector<16x1xf32> to vector<16x16xf32>
    %15 = arith.subf %11, %14 : vector<16x16xf32>
    %16 = math.exp %15 : vector<16x16xf32>
    %cst_7 = arith.constant dense<0.000000e+00> : vector<16xf32>
    %17 = vector.multi_reduction <add>, %16, %cst_7 [1] : vector<16x16xf32> to vector<16xf32>
    %18 = vector.shape_cast %17 : vector<16xf32> to vector<16x1xf32>
    %19 = vector.broadcast %18 : vector<16x1xf32> to vector<16x16xf32>
    %20 = arith.divf %16, %19 : vector<16x16xf32>
    %cst_8 = arith.constant dense<0.000000e+00> : vector<16x8xf32>
    %21 = tpu.matmul %20, %9, %cst_8 {dimension_numbers = #tpu.dot_dimension_numbers<[1], [0], [0], [1], [0, 0, 1, 1], [], []>} : vector<16x16xf32>, vector<16x8xf32>, vector<16x8xf32> -> vector<16x8xf32>
    %22 = vector.extract_strided_slice %5 {offsets = [0, 8], sizes = [16, 8], strides = [1, 1]} : vector<16x128xf32> to vector<16x8xf32>
    %23 = vector.extract_strided_slice %5 {offsets = [0, 40], sizes = [16, 8], strides = [1, 1]} : vector<16x128xf32> to vector<16x8xf32>
    %24 = vector.extract_strided_slice %5 {offsets = [0, 72], sizes = [16, 8], strides = [1, 1]} : vector<16x128xf32> to vector<16x8xf32>
    "tpu.trace_start"() <{level = 10 : i32, message = "qd,kd->qk"}> : () -> ()
    %cst_9 = arith.constant dense<0.000000e+00> : vector<16x16xf32>
    %25 = tpu.matmul %22, %23, %cst_9 {dimension_numbers = #tpu.dot_dimension_numbers<[1], [1], [0], [0], [0, 0, 1, 0], [], []>} : vector<16x8xf32>, vector<16x8xf32>, vector<16x16xf32> -> vector<16x16xf32>
    "tpu.trace_stop"() : () -> ()
    %26 = arith.addf %25, %6 : vector<16x16xf32>
    %cst_10 = arith.constant dense<0xFF800000> : vector<16xf32>
    %27 = vector.multi_reduction <maximumf>, %26, %cst_10 [1] : vector<16x16xf32> to vector<16xf32>
    %28 = vector.shape_cast %27 : vector<16xf32> to vector<16x1xf32>
    %29 = vector.broadcast %28 : vector<16x1xf32> to vector<16x16xf32>
    %30 = arith.subf %26, %29 : vector<16x16xf32>
    %31 = math.exp %30 : vector<16x16xf32>
    %cst_11 = arith.constant dense<0.000000e+00> : vector<16xf32>
    %32 = vector.multi_reduction <add>, %31, %cst_11 [1] : vector<16x16xf32> to vector<16xf32>
    %33 = vector.shape_cast %32 : vector<16xf32> to vector<16x1xf32>
    %34 = vector.broadcast %33 : vector<16x1xf32> to vector<16x16xf32>
    %35 = arith.divf %31, %34 : vector<16x16xf32>
    %cst_12 = arith.constant dense<0.000000e+00> : vector<16x8xf32>
    %36 = tpu.matmul %35, %24, %cst_12 {dimension_numbers = #tpu.dot_dimension_numbers<[1], [0], [0], [1], [0, 0, 1, 1], [], []>} : vector<16x16xf32>, vector<16x8xf32>, vector<16x8xf32> -> vector<16x8xf32>
    %37 = vector.extract_strided_slice %5 {offsets = [0, 16], sizes = [16, 8], strides = [1, 1]} : vector<16x128xf32> to vector<16x8xf32>
    %38 = vector.extract_strided_slice %5 {offsets = [0, 48], sizes = [16, 8], strides = [1, 1]} : vector<16x128xf32> to vector<16x8xf32>
    %39 = vector.extract_strided_slice %5 {offsets = [0, 80], sizes = [16, 8], strides = [1, 1]} : vector<16x128xf32> to vector<16x8xf32>
    "tpu.trace_start"() <{level = 10 : i32, message = "qd,kd->qk"}> : () -> ()
    %cst_13 = arith.constant dense<0.000000e+00> : vector<16x16xf32>
    %40 = tpu.matmul %37, %38, %cst_13 {dimension_numbers = #tpu.dot_dimension_numbers<[1], [1], [0], [0], [0, 0, 1, 0], [], []>} : vector<16x8xf32>, vector<16x8xf32>, vector<16x16xf32> -> vector<16x16xf32>
    "tpu.trace_stop"() : () -> ()
    %41 = arith.addf %40, %6 : vector<16x16xf32>
    %cst_14 = arith.constant dense<0xFF800000> : vector<16xf32>
    %42 = vector.multi_reduction <maximumf>, %41, %cst_14 [1] : vector<16x16xf32> to vector<16xf32>
    %43 = vector.shape_cast %42 : vector<16xf32> to vector<16x1xf32>
    %44 = vector.broadcast %43 : vector<16x1xf32> to vector<16x16xf32>
    %45 = arith.subf %41, %44 : vector<16x16xf32>
    %46 = math.exp %45 : vector<16x16xf32>
    %cst_15 = arith.constant dense<0.000000e+00> : vector<16xf32>
    %47 = vector.multi_reduction <add>, %46, %cst_15 [1] : vector<16x16xf32> to vector<16xf32>
    %48 = vector.shape_cast %47 : vector<16xf32> to vector<16x1xf32>
    %49 = vector.broadcast %48 : vector<16x1xf32> to vector<16x16xf32>
    %50 = arith.divf %46, %49 : vector<16x16xf32>
    %cst_16 = arith.constant dense<0.000000e+00> : vector<16x8xf32>
    %51 = tpu.matmul %50, %39, %cst_16 {dimension_numbers = #tpu.dot_dimension_numbers<[1], [0], [0], [1], [0, 0, 1, 1], [], []>} : vector<16x16xf32>, vector<16x8xf32>, vector<16x8xf32> -> vector<16x8xf32>
    %52 = vector.extract_strided_slice %5 {offsets = [0, 24], sizes = [16, 8], strides = [1, 1]} : vector<16x128xf32> to vector<16x8xf32>
    %53 = vector.extract_strided_slice %5 {offsets = [0, 56], sizes = [16, 8], strides = [1, 1]} : vector<16x128xf32> to vector<16x8xf32>
    %54 = vector.extract_strided_slice %5 {offsets = [0, 88], sizes = [16, 8], strides = [1, 1]} : vector<16x128xf32> to vector<16x8xf32>
    "tpu.trace_start"() <{level = 10 : i32, message = "qd,kd->qk"}> : () -> ()
    %cst_17 = arith.constant dense<0.000000e+00> : vector<16x16xf32>
    %55 = tpu.matmul %52, %53, %cst_17 {dimension_numbers = #tpu.dot_dimension_numbers<[1], [1], [0], [0], [0, 0, 1, 0], [], []>} : vector<16x8xf32>, vector<16x8xf32>, vector<16x16xf32> -> vector<16x16xf32>
    "tpu.trace_stop"() : () -> ()
    %56 = arith.addf %55, %6 : vector<16x16xf32>
    %cst_18 = arith.constant dense<0xFF800000> : vector<16xf32>
    %57 = vector.multi_reduction <maximumf>, %56, %cst_18 [1] : vector<16x16xf32> to vector<16xf32>
    %58 = vector.shape_cast %57 : vector<16xf32> to vector<16x1xf32>
    %59 = vector.broadcast %58 : vector<16x1xf32> to vector<16x16xf32>
    %60 = arith.subf %56, %59 : vector<16x16xf32>
    %61 = math.exp %60 : vector<16x16xf32>
    %cst_19 = arith.constant dense<0.000000e+00> : vector<16xf32>
    %62 = vector.multi_reduction <add>, %61, %cst_19 [1] : vector<16x16xf32> to vector<16xf32>
    %63 = vector.shape_cast %62 : vector<16xf32> to vector<16x1xf32>
    %64 = vector.broadcast %63 : vector<16x1xf32> to vector<16x16xf32>
    %65 = arith.divf %61, %64 : vector<16x16xf32>
    %cst_20 = arith.constant dense<0.000000e+00> : vector<16x8xf32>
    %66 = tpu.matmul %65, %54, %cst_20 {dimension_numbers = #tpu.dot_dimension_numbers<[1], [0], [0], [1], [0, 0, 1, 1], [], []>} : vector<16x16xf32>, vector<16x8xf32>, vector<16x8xf32> -> vector<16x8xf32>
    %67 = tpu.concatenate %21, %36, %51, %66 in 1 : vector<16x8xf32>, vector<16x8xf32>, vector<16x8xf32>, vector<16x8xf32> -> vector<16x32xf32>
    %c32 = arith.constant 32 : index
    %c0_21 = arith.constant 0 : index
    %68 = vector.load %arg2[%c32, %c0_21] : memref<184x128xf32, #tpu.memory_space<vmem>>, vector<32x32xf32>
    %cst_22 = arith.constant dense<0.000000e+00> : vector<16x32xf32>
    %69 = tpu.matmul %67, %68, %cst_22 {dimension_numbers = #tpu.dot_dimension_numbers<[1], [0], [0], [1], [0, 0, 1, 1], [], []>} : vector<16x32xf32>, vector<32x32xf32>, vector<16x32xf32> -> vector<16x32xf32>
    %c161 = arith.constant 161 : index
    %c0_23 = arith.constant 0 : index
    %70 = vector.load %arg2[%c161, %c0_23] : memref<184x128xf32, #tpu.memory_space<vmem>>, vector<1x32xf32>
    %71 = vector.broadcast %70 : vector<1x32xf32> to vector<16x32xf32>
    %72 = arith.addf %69, %71 : vector<16x32xf32>
    %73 = arith.addf %0, %72 : vector<16x32xf32>
    %c162 = arith.constant 162 : index
    %c0_24 = arith.constant 0 : index
    %74 = vector.load %arg2[%c162, %c0_24] : memref<184x128xf32, #tpu.memory_space<vmem>>, vector<1x32xf32>
    %c163 = arith.constant 163 : index
    %c0_25 = arith.constant 0 : index
    %75 = vector.load %arg2[%c163, %c0_25] : memref<184x128xf32, #tpu.memory_space<vmem>>, vector<1x32xf32>
    %cst_26 = arith.constant dense<0.000000e+00> : vector<16xf32>
    %76 = vector.multi_reduction <add>, %73, %cst_26 [1] : vector<16x32xf32> to vector<16xf32>
    %77 = vector.shape_cast %76 : vector<16xf32> to vector<16x1xf32>
    %cst_27 = arith.constant 3.200000e+01 : f32
    %78 = vector.broadcast %cst_27 : f32 to vector<16x1xf32>
    %79 = arith.divf %77, %78 : vector<16x1xf32>
    %80 = vector.broadcast %79 : vector<16x1xf32> to vector<16x32xf32>
    %81 = arith.subf %73, %80 : vector<16x32xf32>
    %82 = arith.mulf %81, %81 : vector<16x32xf32>
    %cst_28 = arith.constant dense<0.000000e+00> : vector<16xf32>
    %83 = vector.multi_reduction <add>, %82, %cst_28 [1] : vector<16x32xf32> to vector<16xf32>
    %84 = vector.shape_cast %83 : vector<16xf32> to vector<16x1xf32>
    %cst_29 = arith.constant 3.200000e+01 : f32
    %85 = vector.broadcast %cst_29 : f32 to vector<16x1xf32>
    %86 = arith.divf %84, %85 : vector<16x1xf32>
    %87 = vector.broadcast %79 : vector<16x1xf32> to vector<16x32xf32>
    %88 = arith.subf %73, %87 : vector<16x32xf32>
    %cst_30 = arith.constant 9.99999974E-6 : f32
    %89 = vector.broadcast %cst_30 : f32 to vector<16x1xf32>
    %90 = arith.addf %86, %89 : vector<16x1xf32>
    %91 = math.rsqrt %90 : vector<16x1xf32>
    %92 = vector.broadcast %91 : vector<16x1xf32> to vector<16x32xf32>
    %93 = arith.mulf %88, %92 : vector<16x32xf32>
    %94 = vector.broadcast %74 : vector<1x32xf32> to vector<16x32xf32>
    %95 = arith.mulf %93, %94 : vector<16x32xf32>
    %96 = vector.broadcast %75 : vector<1x32xf32> to vector<16x32xf32>
    %97 = arith.addf %95, %96 : vector<16x32xf32>
    %c64 = arith.constant 64 : index
    %c0_31 = arith.constant 0 : index
    %98 = vector.load %arg2[%c64, %c0_31] : memref<184x128xf32, #tpu.memory_space<vmem>>, vector<32x64xf32>
    %cst_32 = arith.constant dense<0.000000e+00> : vector<16x64xf32>
    %99 = tpu.matmul %97, %98, %cst_32 {dimension_numbers = #tpu.dot_dimension_numbers<[1], [0], [0], [1], [0, 0, 1, 1], [], []>} : vector<16x32xf32>, vector<32x64xf32>, vector<16x64xf32> -> vector<16x64xf32>
    %c164 = arith.constant 164 : index
    %c0_33 = arith.constant 0 : index
    %100 = vector.load %arg2[%c164, %c0_33] : memref<184x128xf32, #tpu.memory_space<vmem>>, vector<1x64xf32>
    %101 = vector.broadcast %100 : vector<1x64xf32> to vector<16x64xf32>
    %102 = arith.addf %99, %101 : vector<16x64xf32>
    %cst_34 = arith.constant 0.000000e+00 : f32
    %103 = vector.broadcast %cst_34 : f32 to vector<16x64xf32>
    %104 = arith.maximumf %102, %103 : vector<16x64xf32>
    %c96 = arith.constant 96 : index
    %c0_35 = arith.constant 0 : index
    %105 = vector.load %arg2[%c96, %c0_35] : memref<184x128xf32, #tpu.memory_space<vmem>>, vector<64x32xf32>
    %cst_36 = arith.constant dense<0.000000e+00> : vector<16x32xf32>
    %106 = tpu.matmul %104, %105, %cst_36 {dimension_numbers = #tpu.dot_dimension_numbers<[1], [0], [0], [1], [0, 0, 1, 1], [], []>} : vector<16x64xf32>, vector<64x32xf32>, vector<16x32xf32> -> vector<16x32xf32>
    %c165 = arith.constant 165 : index
    %c0_37 = arith.constant 0 : index
    %107 = vector.load %arg2[%c165, %c0_37] : memref<184x128xf32, #tpu.memory_space<vmem>>, vector<1x32xf32>
    %108 = vector.broadcast %107 : vector<1x32xf32> to vector<16x32xf32>
    %109 = arith.addf %106, %108 : vector<16x32xf32>
    %110 = arith.addf %97, %109 : vector<16x32xf32>
    %c166 = arith.constant 166 : index
    %c0_38 = arith.constant 0 : index
    %111 = vector.load %arg2[%c166, %c0_38] : memref<184x128xf32, #tpu.memory_space<vmem>>, vector<1x32xf32>
    %c167 = arith.constant 167 : index
    %c0_39 = arith.constant 0 : index
    %112 = vector.load %arg2[%c167, %c0_39] : memref<184x128xf32, #tpu.memory_space<vmem>>, vector<1x32xf32>
    %cst_40 = arith.constant dense<0.000000e+00> : vector<16xf32>
    %113 = vector.multi_reduction <add>, %110, %cst_40 [1] : vector<16x32xf32> to vector<16xf32>
    %114 = vector.shape_cast %113 : vector<16xf32> to vector<16x1xf32>
    %cst_41 = arith.constant 3.200000e+01 : f32
    %115 = vector.broadcast %cst_41 : f32 to vector<16x1xf32>
    %116 = arith.divf %114, %115 : vector<16x1xf32>
    %117 = vector.broadcast %116 : vector<16x1xf32> to vector<16x32xf32>
    %118 = arith.subf %110, %117 : vector<16x32xf32>
    %119 = arith.mulf %118, %118 : vector<16x32xf32>
    %cst_42 = arith.constant dense<0.000000e+00> : vector<16xf32>
    %120 = vector.multi_reduction <add>, %119, %cst_42 [1] : vector<16x32xf32> to vector<16xf32>
    %121 = vector.shape_cast %120 : vector<16xf32> to vector<16x1xf32>
    %cst_43 = arith.constant 3.200000e+01 : f32
    %122 = vector.broadcast %cst_43 : f32 to vector<16x1xf32>
    %123 = arith.divf %121, %122 : vector<16x1xf32>
    %124 = vector.broadcast %116 : vector<16x1xf32> to vector<16x32xf32>
    %125 = arith.subf %110, %124 : vector<16x32xf32>
    %cst_44 = arith.constant 9.99999974E-6 : f32
    %126 = vector.broadcast %cst_44 : f32 to vector<16x1xf32>
    %127 = arith.addf %123, %126 : vector<16x1xf32>
    %128 = math.rsqrt %127 : vector<16x1xf32>
    %129 = vector.broadcast %128 : vector<16x1xf32> to vector<16x32xf32>
    %130 = arith.mulf %125, %129 : vector<16x32xf32>
    %131 = vector.broadcast %111 : vector<1x32xf32> to vector<16x32xf32>
    %132 = arith.mulf %130, %131 : vector<16x32xf32>
    %133 = vector.broadcast %112 : vector<1x32xf32> to vector<16x32xf32>
    %134 = arith.addf %132, %133 : vector<16x32xf32>
    %c0_45 = arith.constant 0 : index
    %c0_46 = arith.constant 0 : index
    %135 = vector.load %arg3[%c0_45, %c0_46] : memref<16x32xf32, #tpu.memory_space<vmem>>, vector<16x32xf32>
    tpu.vector_store %arg3[%c0_45, %c0_46], %134 {strides = array<i32>} : memref<16x32xf32, #tpu.memory_space<vmem>>, vector<16x32xf32>,
    return
  }
  func.func @transform_0(%arg0: i32) -> (i32, i32) {
    %c0_i32 = arith.constant 0 : i32
    %c0_i32_0 = arith.constant 0 : i32
    %c0_i32_1 = arith.constant 0 : i32
    return %c0_i32, %c0_i32_0 : i32, i32
  }
  func.func @transform_1(%arg0: i32) -> (i32, i32) {
    %c0_i32 = arith.constant 0 : i32
    %c0_i32_0 = arith.constant 0 : i32
    %c0_i32_1 = arith.constant 0 : i32
    return %c0_i32, %c0_i32_0 : i32, i32
  }
  func.func @transform_2(%arg0: i32) -> (i32, i32) {
    %c0_i32 = arith.constant 0 : i32
    %c0_i32_0 = arith.constant 0 : i32
    %c0_i32_1 = arith.constant 0 : i32
    return %c0_i32, %c0_i32_0 : i32, i32
  }
}

</mosaic_0001>

<llo_original>
// kernel: self_attn_channel_forward.1
$region0: #{self_attn_channel_forward.1}
  #allocation0 [shape = 'u32[]', space=smem, size = 0x4, offset = 0x4, fixed_abs, tag = 'smem constant byte address 0x4 - core index']
  #allocation1 [shape = 'u32[72,128]{1,0:T(1,128)}', space=vmem, size = 0x9000, scoped, tag = 'internal scratch']
  %s0 = inlined_call_operand.hbm [shape: f32[16,32], index: 0, kind: input, shape index: {}]
  %s1 = inlined_call_operand.hbm [shape: f32[184,128], index: 1, kind: input, shape index: {}]
  %s2 = inlined_call_operand.hbm [shape: f32[16,32], index: 2, kind: output, shape index: {}]
  %s3 = sld [smem:[#allocation0]]
  $region26: #{self_attn_channel_forward.1} parent=0
    _
  %s5 = ssub.s32 1, %s3
  %s6 = scalar_select 0, %s5, %s3
  $region1: #{self_attn_channel_forward.1} parent=0
    #allocation2 [shape = 'u8[8192]{0}', space=vmem, size = 0x2000, scoped, tag = 'input window, operand 0, single buffered']
    #allocation3 [shape = 's32[1]{0}', space=sflag, size = 0x4, scoped, tag = 'scoped memory for self_attn_channel_forward.1']
    #allocation4 [shape = 's32[1]{0}', space=sflag, size = 0x4, scoped, tag = 'scoped memory for self_attn_channel_forward.1']
    #allocation5 [shape = 'u8[94208]{0}', space=vmem, size = 0x17000, scoped, tag = 'input window, operand 1, single buffered']
    #allocation6 [shape = 's32[1]{0}', space=sflag, size = 0x4, scoped, tag = 'scoped memory for self_attn_channel_forward.1']
    #allocation7 [shape = 'u8[8192]{0}', space=vmem, size = 0x2000, scoped, tag = 'output window, operand 0, single buffered']
    %7 = vsyncpa [#allocation3], 0
    %8 = vsyncpa [#allocation6], 0
    %9 = vsyncpa [#allocation4], 0
    // Predicated region
    $region2: #{self_attn_channel_forward.1} parent=1 // pred_check
      _
    $region3: #{self_attn_channel_forward.1} parent=1 // pred_check_branch
      %11 = sbr.rel (0) target = $region5
    $region4: #{self_attn_channel_forward.1} parent=1 // pred_region
      %13 = vsyncadd [#allocation3], 0
      %s14 = sshll.u32 %s0, 4
      %s15 = int_to_ptr.hbm [resolvable:$true] %s14
      %s16 = sshll.u32 [#allocation2], 4
      %s17 = int_to_ptr.vmem [resolvable:$true] %s16
      %22 = dma.hbm_to_vmem [thread:$0]  %s15, 256, %s17, [#allocation3], 128, 128, 8
    $region5: #{self_attn_channel_forward.1} parent=1 // pred_fallthru
      _
    // Predicated region
    $region6: #{self_attn_channel_forward.1} parent=1 // pred_check
      _
    $region7: #{self_attn_channel_forward.1} parent=1 // pred_check_branch
      %24 = sbr.rel (0) target = $region9
    $region8: #{self_attn_channel_forward.1} parent=1 // pred_region
      %26 = vsyncadd [#allocation6], 0
      %s27 = sshll.u32 %s1, 4
      %s28 = int_to_ptr.hbm [resolvable:$true] %s27
      %s29 = sshll.u32 [#allocation5], 4
      %s30 = int_to_ptr.vmem [resolvable:$true] %s29
      %35 = dma.hbm_to_vmem [thread:$0]  %s28, 2944, %s30, [#allocation6], 128, 128, 8
    $region9: #{self_attn_channel_forward.1} parent=1 // pred_fallthru
      _
    // Predicated region
    $region10: #{self_attn_channel_forward.1} parent=1 // pred_check
      _
    $region11: #{self_attn_channel_forward.1} parent=1 // pred_check_branch
      %37 = sbr.rel (0) target = $region13
    $region12: #{self_attn_channel_forward.1} parent=1 // pred_region
      %39 = dma.done [#allocation3], 256
    $region13: #{self_attn_channel_forward.1} parent=1 // pred_fallthru
      _
    // Predicated region
    $region14: #{self_attn_channel_forward.1} parent=1 // pred_check
      _
    $region15: #{self_attn_channel_forward.1} parent=1 // pred_check_branch
      %41 = sbr.rel (0) target = $region17
    $region16: #{self_attn_channel_forward.1} parent=1 // pred_region
      %43 = dma.done [#allocation6], 2944
    $region17: #{self_attn_channel_forward.1} parent=1 // pred_fallthru
      _
    %v44 = vld [vmem:[#allocation2] sm:$0xff]
    %v45 = vld [vmem:[#allocation2 + $0x8] sm:$0xff]
    %v46 = vld [vmem:[#allocation5] sm:$0xff]
    %v47 = vld [vmem:[#allocation5 + $0x8] sm:$0xff]
    %v48 = vld [vmem:[#allocation5 + $0x10] sm:$0xff]
    %v49 = vld [vmem:[#allocation5 + $0x18] sm:$0xff]
    %v50 = vld [vmem:[#allocation5 + $0xa0] sm:$0x1]
    %v51 = vperm.slane %v50, 0
    %vm52 = vcmask 261120
    %v54 = vsel %vm52, %v44, 0
    %v57 = vsel %vm52, %v45, 0
    %59 = vmatpush.msra.mxu0 0.0
    %60 = vmatpush.msra.mxu0 0.0
    %61 = vmatpush.msra.mxu0 0.0
    %62 = vmatpush.msra.mxu0 0.0
    %63 = vmatpush.msra.mxu0 0.0
    %64 = vmatpush.msra.mxu0 0.0
    %65 = vmatpush.msra.mxu0 0.0
    %66 = vmatpush.msra.mxu0 0.0
    %67 = vmatpush.msra.mxu0 0.0
    %68 = vmatpush.msra.mxu0 0.0
    %69 = vmatpush.msra.mxu0 0.0
    %70 = vmatpush.msra.mxu0 0.0
    %71 = vmatpush.msra.mxu0 %v49
    %72 = vmatpush.msra.mxu0 %v48
    %73 = vmatpush.msra.mxu0 %v47
    %74 = vmatpush.msra.mxu0 %v46
    %75 = vmatmul.f32.gmra.mxu0 %v54
    %v76 = vpop.f32.mrf.mxu0
    %v77 = vadd.f32 %v51, %v76
    %78 = vmatmul.f32.gmra.mxu0 %v57
    %v79 = vpop.f32.mrf.mxu0
    %v80 = vadd.f32 %v51, %v79
    %81 = vdwg.mxu0
    %v82 = vld [vmem:[#allocation5 + $0xa8] sm:$0xff]
    %v83 = vld [vmem:[#allocation5 + $0xb0] sm:$0xff]
    %86 = vrot.lane.b32.xlu0 %v77, 96
    %v87 = vpop.permute.xlu0 %86
    %88 = vrot.lane.b32.xlu0 %v80, 96
    %v89 = vpop.permute.xlu0 %88
    %vm90 = vcmask 64512
    %v91 = vsel %vm90, %v77, 0
    %v93 = vsel %vm90, %v80, 0
    %v95 = vsel %vm90, %v87, 0
    %v97 = vsel %vm90, %v89, 0
    %99 = vmatpush.xpose.msra.mxu0 0.0
    %100 = vmatpush.xpose.msra.mxu0 0.0
    %101 = vmatpush.xpose.msra.mxu0 0.0
    %102 = vmatpush.xpose.msra.mxu0 0.0
    %103 = vmatpush.xpose.msra.mxu0 0.0
    %104 = vmatpush.xpose.msra.mxu0 0.0
    %105 = vmatpush.xpose.msra.mxu0 0.0
    %106 = vmatpush.xpose.msra.mxu0 0.0
    %107 = vmatpush.xpose.msra.mxu0 0.0
    %108 = vmatpush.xpose.msra.mxu0 0.0
    %109 = vmatpush.xpose.msra.mxu0 0.0
    %110 = vmatpush.xpose.msra.mxu0 0.0
    %111 = vmatpush.xpose.msra.mxu0 0.0
    %112 = vmatpush.xpose.msra.mxu0 0.0
    %113 = vmatpush.xpose.msra.mxu0 %v97
    %114 = vmatpush.xpose.msra.mxu0 %v95
    %115 = vmatmul.f32.gmra.mxu0 %v91
    %v116 = vpop.f32.mrf.mxu0
    %v117 = vadd.f32 %v82, %v116
    %118 = vmatmul.f32.gmra.mxu0 %v93
    %v119 = vpop.f32.mrf.mxu0
    %v120 = vadd.f32 %v83, %v119
    %121 = vdwg.mxu0
    %vm122 = vcmask 130048
    %v123 = vsel %vm122, %v117, -inf
    %124 = vmax.xlane.f32.xlu0 %v123
    %v125 = vpop.xlane.xlu0 %124
    %v126 = vsel %vm122, %v120, -inf
    %127 = vmax.xlane.f32.xlu0 %v126
    %v128 = vpop.xlane.xlu0 %127
    %v129 = vsub.f32 %v117, %v125
    %v130 = vsub.f32 %v120, %v128
    %v131 = vmul.f32 %v129, 1.442695
    %v132 = vpow.pop %v131
    %v133 = vmul.f32 %v130, 1.442695
    %v134 = vpow.pop %v133
    %v135 = vsel %vm122, %v132, 0.0
    %136 = vadd.xlane.f32.xlu0 %v135
    %v137 = vpop.xlane.xlu0 %136
    %v138 = vsel %vm122, %v134, 0.0
    %139 = vadd.xlane.f32.xlu0 %v138
    %v140 = vpop.xlane.xlu0 %139
    %v141 = vrcp.pop %v137
    %v142 = vmul.f32 %v137, %v141
    %v143 = vsub.f32 1.0, %v142
    %v144 = vmul.f32 %v141, %v143
    %v145 = vadd.f32 %v141, %v144
    %vm146 = vweird.f32 %v137
    %vm147 = vweird.f32 %v141
    %vm148 = vmor %vm146, %vm147
    %v149 = vsel %vm148, %v141, %v145
    %v150 = vand.u32 2147483647, %v137
    %vm151 = vcmp.eq.f32.partialorder %v150, 8.507059e+37
    %v152 = vand.u32 %v137, 2147483648
    %v153 = vor.u32 1.1754944e-38, %v152
    %v154 = vsel %vm151, %v153, %v149
    %v155 = vmul.f32 %v132, %v154
    %v156 = vrcp.pop %v140
    %v157 = vmul.f32 %v140, %v156
    %v158 = vsub.f32 1.0, %v157
    %v159 = vmul.f32 %v156, %v158
    %v160 = vadd.f32 %v156, %v159
    %vm161 = vweird.f32 %v140
    %vm162 = vweird.f32 %v156
    %vm163 = vmor %vm161, %vm162
    %v164 = vsel %vm163, %v156, %v160
    %v165 = vand.u32 2147483647, %v140
    %vm166 = vcmp.eq.f32.partialorder %v165, 8.507059e+37
    %v167 = vand.u32 %v140, 2147483648
    %v168 = vor.u32 1.1754944e-38, %v167
    %v169 = vsel %vm166, %v168, %v164
    %v170 = vmul.f32 %v134, %v169
    %171 = vrot.lane.b32.xlu0 %v77, 64
    %v172 = vpop.permute.xlu0 %171
    %173 = vrot.lane.b32.xlu0 %v80, 64
    %v174 = vpop.permute.xlu0 %173
    %v178 = vsel %vm122, %v155, 0
    %v181 = vsel %vm122, %v170, 0
    %183 = vmatpush.msra.mxu0 0.0
    %184 = vmatpush.msra.mxu0 0.0
    %185 = vmatpush.msra.mxu0 0.0
    %186 = vmatpush.msra.mxu0 0.0
    %187 = vmatpush.msra.mxu0 0.0
    %188 = vmatpush.msra.mxu0 0.0
    %189 = vmatpush.msra.mxu0 0.0
    %190 = vmatpush.msra.mxu0 0.0
    %191 = vmatpush.msra.mxu0 0.0
    %192 = vmatpush.msra.mxu0 0.0
    %193 = vmatpush.msra.mxu0 0.0
    %194 = vmatpush.msra.mxu0 0.0
    %195 = vmatpush.msra.mxu0 0.0
    %196 = vmatpush.msra.mxu0 0.0
    %197 = vmatpush.msra.mxu0 %v174
    %198 = vmatpush.msra.mxu0 %v172
    %199 = vmatmul.f32.gmra.mxu0 %v178
    %v200 = vpop.f32.mrf.mxu0
    %v201 = vadd.f32 0.0, %v200
    %202 = vmatmul.f32.gmra.mxu0 %v181
    %v203 = vpop.f32.mrf.mxu0
    %v204 = vadd.f32 0.0, %v203
    %205 = vdwg.mxu0
    %206 = vrot.lane.b32.xlu0 %v77, 120
    %v207 = vpop.permute.xlu0 %206
    %208 = vrot.lane.b32.xlu0 %v80, 120
    %v209 = vpop.permute.xlu0 %208
    %210 = vrot.lane.b32.xlu0 %v77, 88
    %v211 = vpop.permute.xlu0 %210
    %212 = vrot.lane.b32.xlu0 %v80, 88
    %v213 = vpop.permute.xlu0 %212
    %v214 = vsel %vm90, %v207, 0
    %v216 = vsel %vm90, %v209, 0
    %v218 = vsel %vm90, %v211, 0
    %v220 = vsel %vm90, %v213, 0
    %222 = vmatpush.xpose.msra.mxu0 0.0
    %223 = vmatpush.xpose.msra.mxu0 0.0
    %224 = vmatpush.xpose.msra.mxu0 0.0
    %225 = vmatpush.xpose.msra.mxu0 0.0
    %226 = vmatpush.xpose.msra.mxu0 0.0
    %227 = vmatpush.xpose.msra.mxu0 0.0
    %228 = vmatpush.xpose.msra.mxu0 0.0
    %229 = vmatpush.xpose.msra.mxu0 0.0
    %230 = vmatpush.xpose.msra.mxu0 0.0
    %231 = vmatpush.xpose.msra.mxu0 0.0
    %232 = vmatpush.xpose.msra.mxu0 0.0
    %233 = vmatpush.xpose.msra.mxu0 0.0
    %234 = vmatpush.xpose.msra.mxu0 0.0
    %235 = vmatpush.xpose.msra.mxu0 0.0
    %236 = vmatpush.xpose.msra.mxu0 %v220
    %237 = vmatpush.xpose.msra.mxu0 %v218
    %238 = vmatmul.f32.gmra.mxu0 %v214
    %v239 = vpop.f32.mrf.mxu0
    %v240 = vadd.f32 %v82, %v239
    %241 = vmatmul.f32.gmra.mxu0 %v216
    %v242 = vpop.f32.mrf.mxu0
    %v243 = vadd.f32 %v83, %v242
    %244 = vdwg.mxu0
    %v245 = vsel %vm122, %v240, -inf
    %246 = vmax.xlane.f32.xlu0 %v245
    %v247 = vpop.xlane.xlu0 %246
    %v248 = vsel %vm122, %v243, -inf
    %249 = vmax.xlane.f32.xlu0 %v248
    %v250 = vpop.xlane.xlu0 %249
    %v251 = vsub.f32 %v240, %v247
    %v252 = vsub.f32 %v243, %v250
    %v253 = vmul.f32 %v251, 1.442695
    %v254 = vpow.pop %v253
    %v255 = vmul.f32 %v252, 1.442695
    %v256 = vpow.pop %v255
    %v257 = vsel %vm122, %v254, 0.0
    %258 = vadd.xlane.f32.xlu0 %v257
    %v259 = vpop.xlane.xlu0 %258
    %v260 = vsel %vm122, %v256, 0.0
    %261 = vadd.xlane.f32.xlu0 %v260
    %v262 = vpop.xlane.xlu0 %261
    %v263 = vrcp.pop %v259
    %v264 = vmul.f32 %v259, %v263
    %v265 = vsub.f32 1.0, %v264
    %v266 = vmul.f32 %v263, %v265
    %v267 = vadd.f32 %v263, %v266
    %vm268 = vweird.f32 %v259
    %vm269 = vweird.f32 %v263
    %vm270 = vmor %vm268, %vm269
    %v271 = vsel %vm270, %v263, %v267
    %v272 = vand.u32 2147483647, %v259
    %vm273 = vcmp.eq.f32.partialorder %v272, 8.507059e+37
    %v274 = vand.u32 %v259, 2147483648
    %v275 = vor.u32 1.1754944e-38, %v274
    %v276 = vsel %vm273, %v275, %v271
    %v277 = vmul.f32 %v254, %v276
    %v278 = vrcp.pop %v262
    %v279 = vmul.f32 %v262, %v278
    %v280 = vsub.f32 1.0, %v279
    %v281 = vmul.f32 %v278, %v280
    %v282 = vadd.f32 %v278, %v281
    %vm283 = vweird.f32 %v262
    %vm284 = vweird.f32 %v278
    %vm285 = vmor %vm283, %vm284
    %v286 = vsel %vm285, %v278, %v282
    %v287 = vand.u32 2147483647, %v262
    %vm288 = vcmp.eq.f32.partialorder %v287, 8.507059e+37
    %v289 = vand.u32 %v262, 2147483648
    %v290 = vor.u32 1.1754944e-38, %v289
    %v291 = vsel %vm288, %v290, %v286
    %v292 = vmul.f32 %v256, %v291
    %293 = vrot.lane.b32.xlu0 %v77, 56
    %v294 = vpop.permute.xlu0 %293
    %295 = vrot.lane.b32.xlu0 %v80, 56
    %v296 = vpop.permute.xlu0 %295
    %v300 = vsel %vm122, %v277, 0
    %v303 = vsel %vm122, %v292, 0
    %305 = vmatpush.msra.mxu0 0.0
    %306 = vmatpush.msra.mxu0 0.0
    %307 = vmatpush.msra.mxu0 0.0
    %308 = vmatpush.msra.mxu0 0.0
    %309 = vmatpush.msra.mxu0 0.0
    %310 = vmatpush.msra.mxu0 0.0
    %311 = vmatpush.msra.mxu0 0.0
    %312 = vmatpush.msra.mxu0 0.0
    %313 = vmatpush.msra.mxu0 0.0
    %314 = vmatpush.msra.mxu0 0.0
    %315 = vmatpush.msra.mxu0 0.0
    %316 = vmatpush.msra.mxu0 0.0
    %317 = vmatpush.msra.mxu0 0.0
    %318 = vmatpush.msra.mxu0 0.0
    %319 = vmatpush.msra.mxu0 %v296
    %320 = vmatpush.msra.mxu0 %v294
    %321 = vmatmul.f32.gmra.mxu0 %v300
    %v322 = vpop.f32.mrf.mxu0
    %v323 = vadd.f32 0.0, %v322
    %324 = vmatmul.f32.gmra.mxu0 %v303
    %v325 = vpop.f32.mrf.mxu0
    %v326 = vadd.f32 0.0, %v325
    %327 = vdwg.mxu0
    %328 = vrot.lane.b32.xlu0 %v77, 112
    %v329 = vpop.permute.xlu0 %328
    %330 = vrot.lane.b32.xlu0 %v80, 112
    %v331 = vpop.permute.xlu0 %330
    %332 = vrot.lane.b32.xlu0 %v77, 80
    %v333 = vpop.permute.xlu0 %332
    %334 = vrot.lane.b32.xlu0 %v80, 80
    %v335 = vpop.permute.xlu0 %334
    %v336 = vsel %vm90, %v329, 0
    %v338 = vsel %vm90, %v331, 0
    %v340 = vsel %vm90, %v333, 0
    %v342 = vsel %vm90, %v335, 0
    %344 = vmatpush.xpose.msra.mxu0 0.0
    %345 = vmatpush.xpose.msra.mxu0 0.0
    %346 = vmatpush.xpose.msra.mxu0 0.0
    %347 = vmatpush.xpose.msra.mxu0 0.0
    %348 = vmatpush.xpose.msra.mxu0 0.0
    %349 = vmatpush.xpose.msra.mxu0 0.0
    %350 = vmatpush.xpose.msra.mxu0 0.0
    %351 = vmatpush.xpose.msra.mxu0 0.0
    %352 = vmatpush.xpose.msra.mxu0 0.0
    %353 = vmatpush.xpose.msra.mxu0 0.0
    %354 = vmatpush.xpose.msra.mxu0 0.0
    %355 = vmatpush.xpose.msra.mxu0 0.0
    %356 = vmatpush.xpose.msra.mxu0 0.0
    %357 = vmatpush.xpose.msra.mxu0 0.0
    %358 = vmatpush.xpose.msra.mxu0 %v342
    %359 = vmatpush.xpose.msra.mxu0 %v340
    %360 = vmatmul.f32.gmra.mxu0 %v336
    %v361 = vpop.f32.mrf.mxu0
    %v362 = vadd.f32 %v82, %v361
    %363 = vmatmul.f32.gmra.mxu0 %v338
    %v364 = vpop.f32.mrf.mxu0
    %v365 = vadd.f32 %v83, %v364
    %366 = vdwg.mxu0
    %v367 = vsel %vm122, %v362, -inf
    %368 = vmax.xlane.f32.xlu0 %v367
    %v369 = vpop.xlane.xlu0 %368
    %v370 = vsel %vm122, %v365, -inf
    %371 = vmax.xlane.f32.xlu0 %v370
    %v372 = vpop.xlane.xlu0 %371
    %v373 = vsub.f32 %v362, %v369
    %v374 = vsub.f32 %v365, %v372
    %v375 = vmul.f32 %v373, 1.442695
    %v376 = vpow.pop %v375
    %v377 = vmul.f32 %v374, 1.442695
    %v378 = vpow.pop %v377
    %v379 = vsel %vm122, %v376, 0.0
    %380 = vadd.xlane.f32.xlu0 %v379
    %v381 = vpop.xlane.xlu0 %380
    %v382 = vsel %vm122, %v378, 0.0
    %383 = vadd.xlane.f32.xlu0 %v382
    %v384 = vpop.xlane.xlu0 %383
    %v385 = vrcp.pop %v381
    %v386 = vmul.f32 %v381, %v385
    %v387 = vsub.f32 1.0, %v386
    %v388 = vmul.f32 %v385, %v387
    %v389 = vadd.f32 %v385, %v388
    %vm390 = vweird.f32 %v381
    %vm391 = vweird.f32 %v385
    %vm392 = vmor %vm390, %vm391
    %v393 = vsel %vm392, %v385, %v389
    %v394 = vand.u32 2147483647, %v381
    %vm395 = vcmp.eq.f32.partialorder %v394, 8.507059e+37
    %v396 = vand.u32 %v381, 2147483648
    %v397 = vor.u32 1.1754944e-38, %v396
    %v398 = vsel %vm395, %v397, %v393
    %v399 = vmul.f32 %v376, %v398
    %v400 = vrcp.pop %v384
    %v401 = vmul.f32 %v384, %v400
    %v402 = vsub.f32 1.0, %v401
    %v403 = vmul.f32 %v400, %v402
    %v404 = vadd.f32 %v400, %v403
    %vm405 = vweird.f32 %v384
    %vm406 = vweird.f32 %v400
    %vm407 = vmor %vm405, %vm406
    %v408 = vsel %vm407, %v400, %v404
    %v409 = vand.u32 2147483647, %v384
    %vm410 = vcmp.eq.f32.partialorder %v409, 8.507059e+37
    %v411 = vand.u32 %v384, 2147483648
    %v412 = vor.u32 1.1754944e-38, %v411
    %v413 = vsel %vm410, %v412, %v408
    %v414 = vmul.f32 %v378, %v413
    %415 = vrot.lane.b32.xlu0 %v77, 48
    %v416 = vpop.permute.xlu0 %415
    %417 = vrot.lane.b32.xlu0 %v80, 48
    %v418 = vpop.permute.xlu0 %417
    %v422 = vsel %vm122, %v399, 0
    %v425 = vsel %vm122, %v414, 0
    %427 = vmatpush.msra.mxu0 0.0
    %428 = vmatpush.msra.mxu0 0.0
    %429 = vmatpush.msra.mxu0 0.0
    %430 = vmatpush.msra.mxu0 0.0
    %431 = vmatpush.msra.mxu0 0.0
    %432 = vmatpush.msra.mxu0 0.0
    %433 = vmatpush.msra.mxu0 0.0
    %434 = vmatpush.msra.mxu0 0.0
    %435 = vmatpush.msra.mxu0 0.0
    %436 = vmatpush.msra.mxu0 0.0
    %437 = vmatpush.msra.mxu0 0.0
    %438 = vmatpush.msra.mxu0 0.0
    %439 = vmatpush.msra.mxu0 0.0
    %440 = vmatpush.msra.mxu0 0.0
    %441 = vmatpush.msra.mxu0 %v418
    %442 = vmatpush.msra.mxu0 %v416
    %443 = vmatmul.f32.gmra.mxu0 %v422
    %v444 = vpop.f32.mrf.mxu0
    %v445 = vadd.f32 0.0, %v444
    %446 = vmatmul.f32.gmra.mxu0 %v425
    %v447 = vpop.f32.mrf.mxu0
    %v448 = vadd.f32 0.0, %v447
    %449 = vdwg.mxu0
    %450 = vrot.lane.b32.xlu0 %v77, 104
    %v451 = vpop.permute.xlu0 %450
    %452 = vrot.lane.b32.xlu0 %v80, 104
    %v453 = vpop.permute.xlu0 %452
    %454 = vrot.lane.b32.xlu0 %v77, 72
    %v455 = vpop.permute.xlu0 %454
    %456 = vrot.lane.b32.xlu0 %v80, 72
    %v457 = vpop.permute.xlu0 %456
    %v458 = vsel %vm90, %v451, 0
    %v460 = vsel %vm90, %v453, 0
    %v462 = vsel %vm90, %v455, 0
    %v464 = vsel %vm90, %v457, 0
    %466 = vmatpush.xpose.msra.mxu0 0.0
    %467 = vmatpush.xpose.msra.mxu0 0.0
    %468 = vmatpush.xpose.msra.mxu0 0.0
    %469 = vmatpush.xpose.msra.mxu0 0.0
    %470 = vmatpush.xpose.msra.mxu0 0.0
    %471 = vmatpush.xpose.msra.mxu0 0.0
    %472 = vmatpush.xpose.msra.mxu0 0.0
    %473 = vmatpush.xpose.msra.mxu0 0.0
    %474 = vmatpush.xpose.msra.mxu0 0.0
    %475 = vmatpush.xpose.msra.mxu0 0.0
    %476 = vmatpush.xpose.msra.mxu0 0.0
    %477 = vmatpush.xpose.msra.mxu0 0.0
    %478 = vmatpush.xpose.msra.mxu0 0.0
    %479 = vmatpush.xpose.msra.mxu0 0.0
    %480 = vmatpush.xpose.msra.mxu0 %v464
    %481 = vmatpush.xpose.msra.mxu0 %v462
    %482 = vmatmul.f32.gmra.mxu0 %v458
    %v483 = vpop.f32.mrf.mxu0
    %v484 = vadd.f32 %v82, %v483
    %485 = vmatmul.f32.gmra.mxu0 %v460
    %v486 = vpop.f32.mrf.mxu0
    %v487 = vadd.f32 %v83, %v486
    %488 = vdwg.mxu0
    %v489 = vsel %vm122, %v484, -inf
    %490 = vmax.xlane.f32.xlu0 %v489
    %v491 = vpop.xlane.xlu0 %490
    %v492 = vsel %vm122, %v487, -inf
    %493 = vmax.xlane.f32.xlu0 %v492
    %v494 = vpop.xlane.xlu0 %493
    %v495 = vsub.f32 %v484, %v491
    %v496 = vsub.f32 %v487, %v494
    %v497 = vmul.f32 %v495, 1.442695
    %v498 = vpow.pop %v497
    %v499 = vmul.f32 %v496, 1.442695
    %v500 = vpow.pop %v499
    %v501 = vsel %vm122, %v498, 0.0
    %502 = vadd.xlane.f32.xlu0 %v501
    %v503 = vpop.xlane.xlu0 %502
    %v504 = vsel %vm122, %v500, 0.0
    %505 = vadd.xlane.f32.xlu0 %v504
    %v506 = vpop.xlane.xlu0 %505
    %v507 = vrcp.pop %v503
    %v508 = vmul.f32 %v503, %v507
    %v509 = vsub.f32 1.0, %v508
    %v510 = vmul.f32 %v507, %v509
    %v511 = vadd.f32 %v507, %v510
    %vm512 = vweird.f32 %v503
    %vm513 = vweird.f32 %v507
    %vm514 = vmor %vm512, %vm513
    %v515 = vsel %vm514, %v507, %v511
    %v516 = vand.u32 2147483647, %v503
    %vm517 = vcmp.eq.f32.partialorder %v516, 8.507059e+37
    %v518 = vand.u32 %v503, 2147483648
    %v519 = vor.u32 1.1754944e-38, %v518
    %v520 = vsel %vm517, %v519, %v515
    %v521 = vmul.f32 %v498, %v520
    %v522 = vrcp.pop %v506
    %v523 = vmul.f32 %v506, %v522
    %v524 = vsub.f32 1.0, %v523
    %v525 = vmul.f32 %v522, %v524
    %v526 = vadd.f32 %v522, %v525
    %vm527 = vweird.f32 %v506
    %vm528 = vweird.f32 %v522
    %vm529 = vmor %vm527, %vm528
    %v530 = vsel %vm529, %v522, %v526
    %v531 = vand.u32 2147483647, %v506
    %vm532 = vcmp.eq.f32.partialorder %v531, 8.507059e+37
    %v533 = vand.u32 %v506, 2147483648
    %v534 = vor.u32 1.1754944e-38, %v533
    %v535 = vsel %vm532, %v534, %v530
    %v536 = vmul.f32 %v500, %v535
    %537 = vrot.lane.b32.xlu0 %v77, 40
    %v538 = vpop.permute.xlu0 %537
    %539 = vrot.lane.b32.xlu0 %v80, 40
    %v540 = vpop.permute.xlu0 %539
    %v544 = vsel %vm122, %v521, 0
    %v547 = vsel %vm122, %v536, 0
    %549 = vmatpush.msra.mxu0 0.0
    %550 = vmatpush.msra.mxu0 0.0
    %551 = vmatpush.msra.mxu0 0.0
    %552 = vmatpush.msra.mxu0 0.0
    %553 = vmatpush.msra.mxu0 0.0
    %554 = vmatpush.msra.mxu0 0.0
    %555 = vmatpush.msra.mxu0 0.0
    %556 = vmatpush.msra.mxu0 0.0
    %557 = vmatpush.msra.mxu0 0.0
    %558 = vmatpush.msra.mxu0 0.0
    %559 = vmatpush.msra.mxu0 0.0
    %560 = vmatpush.msra.mxu0 0.0
    %561 = vmatpush.msra.mxu0 0.0
    %562 = vmatpush.msra.mxu0 0.0
    %563 = vmatpush.msra.mxu0 %v540
    %564 = vmatpush.msra.mxu0 %v538
    %565 = vmatmul.f32.gmra.mxu0 %v544
    %v566 = vpop.f32.mrf.mxu0
    %v567 = vadd.f32 0.0, %v566
    %568 = vmatmul.f32.gmra.mxu0 %v547
    %v569 = vpop.f32.mrf.mxu0
    %v570 = vadd.f32 0.0, %v569
    %571 = vdwg.mxu0
    %574 = vrot.lane.b32.xlu0 %v323, 8
    %v575 = vpop.permute.xlu0 %574
    %576 = vrot.lane.b32.xlu0 %v326, 8
    %v577 = vpop.permute.xlu0 %576
    %582 = vrot.lane.b32.xlu0 %v445, 16
    %v583 = vpop.permute.xlu0 %582
    %584 = vrot.lane.b32.xlu0 %v448, 16
    %v585 = vpop.permute.xlu0 %584
    %590 = vrot.lane.b32.xlu0 %v567, 24
    %v591 = vpop.permute.xlu0 %590
    %592 = vrot.lane.b32.xlu0 %v570, 24
    %v593 = vpop.permute.xlu0 %592
    %v596 = vsel %vm90, %v201, %v575
    %v597 = vsel %vm90, %v204, %v577
    %v598 = vsel %vm122, %v596, %v583
    %v599 = vsel %vm122, %v597, %v585
    %vm600 = vcmask 195584
    %v601 = vsel %vm600, %v598, %v591
    %v602 = vsel %vm600, %v599, %v593
    %v603 = vld [vmem:[#allocation5 + $0x20] sm:$0xff]
    %v604 = vld [vmem:[#allocation5 + $0x28] sm:$0xff]
    %v605 = vld [vmem:[#allocation5 + $0x30] sm:$0xff]
    %v606 = vld [vmem:[#allocation5 + $0x38] sm:$0xff]
    %v607 = vld [vmem:[#allocation5 + $0xa1] sm:$0x1]
    %v608 = vperm.slane %v607, 0
    %v610 = vsel %vm52, %v601, 0
    %v613 = vsel %vm52, %v602, 0
    %615 = vmatpush.msra.mxu0 0.0
    %616 = vmatpush.msra.mxu0 0.0
    %617 = vmatpush.msra.mxu0 0.0
    %618 = vmatpush.msra.mxu0 0.0
    %619 = vmatpush.msra.mxu0 0.0
    %620 = vmatpush.msra.mxu0 0.0
    %621 = vmatpush.msra.mxu0 0.0
    %622 = vmatpush.msra.mxu0 0.0
    %623 = vmatpush.msra.mxu0 0.0
    %624 = vmatpush.msra.mxu0 0.0
    %625 = vmatpush.msra.mxu0 0.0
    %626 = vmatpush.msra.mxu0 0.0
    %627 = vmatpush.msra.mxu0 %v606
    %628 = vmatpush.msra.mxu0 %v605
    %629 = vmatpush.msra.mxu0 %v604
    %630 = vmatpush.msra.mxu0 %v603
    %631 = vmatmul.f32.gmra.mxu0 %v610
    %v632 = vpop.f32.mrf.mxu0
    %v633 = vadd.f32 %v608, %v632
    %634 = vmatmul.f32.gmra.mxu0 %v613
    %v635 = vpop.f32.mrf.mxu0
    %v636 = vadd.f32 %v608, %v635
    %637 = vdwg.mxu0
    %v638 = vadd.f32 %v44, %v633
    %v639 = vadd.f32 %v45, %v636
    %v640 = vld [vmem:[#allocation5 + $0xa2] sm:$0x1]
    %v641 = vld [vmem:[#allocation5 + $0xa3] sm:$0x1]
    %v642 = vsel %vm52, %v638, 0.0
    %643 = vadd.xlane.f32.xlu0 %v642
    %v644 = vpop.xlane.xlu0 %643
    %v645 = vsel %vm52, %v639, 0.0
    %646 = vadd.xlane.f32.xlu0 %v645
    %v647 = vpop.xlane.xlu0 %646
    %v648 = vrcp.pop 32.0
    %v649 = vmul.f32 32.0, %v648
    %v650 = vsub.f32 1.0, %v649
    %v651 = vmul.f32 %v648, %v650
    %v652 = vadd.f32 %v648, %v651
    %vm653 = vweird.f32 %v648
    %v654 = vsel %vm653, %v648, %v652
    %v655 = vmul.f32 %v644, %v654
    %v656 = vmul.f32 %v647, %v654
    %v657 = vsub.f32 %v638, %v655
    %v658 = vsub.f32 %v639, %v656
    %v659 = vmul.f32 %v657, %v657
    %v660 = vmul.f32 %v658, %v658
    %v661 = vsel %vm52, %v659, 0.0
    %662 = vadd.xlane.f32.xlu0 %v661
    %v663 = vpop.xlane.xlu0 %662
    %v664 = vsel %vm52, %v660, 0.0
    %665 = vadd.xlane.f32.xlu0 %v664
    %v666 = vpop.xlane.xlu0 %665
    %v667 = vmul.f32 %v663, %v654
    %v668 = vmul.f32 %v666, %v654
    %v669 = vadd.f32 %v667, 1e-05
    %v670 = vadd.f32 %v668, 1e-05
    %v671 = vrsqrt.pop %v669
    %v672 = vmul.f32 %v671, %v669
    %v673 = vmul.f32 %v672, %v671
    %v674 = vmul.f32 0.5, %v673
    %v675 = vsub.f32 1.5, %v674
    %v676 = vmul.f32 %v671, %v675
    %vm677 = vweird.f32 %v669
    %vm678 = vweird.f32 %v671
    %vm679 = vmor %vm677, %vm678
    %v680 = vsel %vm679, %v671, %v676
    %v681 = vrsqrt.pop %v670
    %v682 = vmul.f32 %v681, %v670
    %v683 = vmul.f32 %v682, %v681
    %v684 = vmul.f32 0.5, %v683
    %v685 = vsub.f32 1.5, %v684
    %v686 = vmul.f32 %v681, %v685
    %vm687 = vweird.f32 %v670
    %vm688 = vweird.f32 %v681
    %vm689 = vmor %vm687, %vm688
    %v690 = vsel %vm689, %v681, %v686
    %v691 = vmul.f32 %v657, %v680
    %v692 = vmul.f32 %v658, %v690
    %v693 = vperm.slane %v640, 0
    %v694 = vmul.f32 %v691, %v693
    %v695 = vmul.f32 %v692, %v693
    %v696 = vperm.slane %v641, 0
    %v697 = vadd.f32 %v694, %v696
    %v698 = vadd.f32 %v695, %v696
    %v699 = vld [vmem:[#allocation5 + $0x40] sm:$0xff]
    %v700 = vld [vmem:[#allocation5 + $0x48] sm:$0xff]
    %v701 = vld [vmem:[#allocation5 + $0x50] sm:$0xff]
    %v702 = vld [vmem:[#allocation5 + $0x58] sm:$0xff]
    %v703 = vld [vmem:[#allocation5 + $0xa4] sm:$0x1]
    %v704 = vperm.slane %v703, 0
    %v706 = vsel %vm52, %v697, 0
    %v709 = vsel %vm52, %v698, 0
    %711 = vmatpush.msra.mxu0 0.0
    %712 = vmatpush.msra.mxu0 0.0
    %713 = vmatpush.msra.mxu0 0.0
    %714 = vmatpush.msra.mxu0 0.0
    %715 = vmatpush.msra.mxu0 0.0
    %716 = vmatpush.msra.mxu0 0.0
    %717 = vmatpush.msra.mxu0 0.0
    %718 = vmatpush.msra.mxu0 0.0
    %719 = vmatpush.msra.mxu0 0.0
    %720 = vmatpush.msra.mxu0 0.0
    %721 = vmatpush.msra.mxu0 0.0
    %722 = vmatpush.msra.mxu0 0.0
    %723 = vmatpush.msra.mxu0 %v702
    %724 = vmatpush.msra.mxu0 %v701
    %725 = vmatpush.msra.mxu0 %v700
    %726 = vmatpush.msra.mxu0 %v699
    %727 = vmatmul.f32.gmra.mxu0 %v706
    %v728 = vpop.f32.mrf.mxu0
    %v729 = vadd.f32 %v704, %v728
    %730 = vmatmul.f32.gmra.mxu0 %v709
    %v731 = vpop.f32.mrf.mxu0
    %v732 = vadd.f32 %v704, %v731
    %733 = vdwg.mxu0
    %v734 = vmax.f32 %v729, 0.0
    %v735 = vmax.f32 %v732, 0.0
    %v736 = vld [vmem:[#allocation5 + $0x60] sm:$0xff]
    %v737 = vld [vmem:[#allocation5 + $0x68] sm:$0xff]
    %v738 = vld [vmem:[#allocation5 + $0x70] sm:$0xff]
    %v739 = vld [vmem:[#allocation5 + $0x78] sm:$0xff]
    %v740 = vld [vmem:[#allocation5 + $0x80] sm:$0xff]
    %v741 = vld [vmem:[#allocation5 + $0x88] sm:$0xff]
    %v742 = vld [vmem:[#allocation5 + $0x90] sm:$0xff]
    %v743 = vld [vmem:[#allocation5 + $0x98] sm:$0xff]
    %v744 = vld [vmem:[#allocation5 + $0xa5] sm:$0x1]
    %v745 = vperm.slane %v744, 0
    %vm746 = vcmask 523264
    %v748 = vsel %vm746, %v734, 0
    %v751 = vsel %vm746, %v735, 0
    %753 = vmatpush.msra.mxu0 0.0
    %754 = vmatpush.msra.mxu0 0.0
    %755 = vmatpush.msra.mxu0 0.0
    %756 = vmatpush.msra.mxu0 0.0
    %757 = vmatpush.msra.mxu0 0.0
    %758 = vmatpush.msra.mxu0 0.0
    %759 = vmatpush.msra.mxu0 0.0
    %760 = vmatpush.msra.mxu0 0.0
    %761 = vmatpush.msra.mxu0 %v743
    %762 = vmatpush.msra.mxu0 %v742
    %763 = vmatpush.msra.mxu0 %v741
    %764 = vmatpush.msra.mxu0 %v740
    %765 = vmatpush.msra.mxu0 %v739
    %766 = vmatpush.msra.mxu0 %v738
    %767 = vmatpush.msra.mxu0 %v737
    %768 = vmatpush.msra.mxu0 %v736
    %769 = vmatmul.f32.gmra.mxu0 %v748
    %v770 = vpop.f32.mrf.mxu0
    %v771 = vadd.f32 %v745, %v770
    %772 = vmatmul.f32.gmra.mxu0 %v751
    %v773 = vpop.f32.mrf.mxu0
    %v774 = vadd.f32 %v745, %v773
    %775 = vdwg.mxu0
    %v776 = vadd.f32 %v697, %v771
    %v777 = vadd.f32 %v698, %v774
    %v778 = vld [vmem:[#allocation5 + $0xa6] sm:$0x1]
    %v779 = vld [vmem:[#allocation5 + $0xa7] sm:$0x1]
    %v780 = vsel %vm52, %v776, 0.0
    %781 = vadd.xlane.f32.xlu0 %v780
    %v782 = vpop.xlane.xlu0 %781
    %v783 = vsel %vm52, %v777, 0.0
    %784 = vadd.xlane.f32.xlu0 %v783
    %v785 = vpop.xlane.xlu0 %784
    %v786 = vmul.f32 %v782, %v654
    %v787 = vmul.f32 %v785, %v654
    %v788 = vsub.f32 %v776, %v786
    %v789 = vsub.f32 %v777, %v787
    %v790 = vmul.f32 %v788, %v788
    %v791 = vmul.f32 %v789, %v789
    %v792 = vsel %vm52, %v790, 0.0
    %793 = vadd.xlane.f32.xlu0 %v792
    %v794 = vpop.xlane.xlu0 %793
    %v795 = vsel %vm52, %v791, 0.0
    %796 = vadd.xlane.f32.xlu0 %v795
    %v797 = vpop.xlane.xlu0 %796
    %v798 = vmul.f32 %v794, %v654
    %v799 = vmul.f32 %v797, %v654
    %v800 = vadd.f32 %v798, 1e-05
    %v801 = vadd.f32 %v799, 1e-05
    %v802 = vrsqrt.pop %v800
    %v803 = vmul.f32 %v802, %v800
    %v804 = vmul.f32 %v803, %v802
    %v805 = vmul.f32 0.5, %v804
    %v806 = vsub.f32 1.5, %v805
    %v807 = vmul.f32 %v802, %v806
    %vm808 = vweird.f32 %v800
    %vm809 = vweird.f32 %v802
    %vm810 = vmor %vm808, %vm809
    %v811 = vsel %vm810, %v802, %v807
    %v812 = vrsqrt.pop %v801
    %v813 = vmul.f32 %v812, %v801
    %v814 = vmul.f32 %v813, %v812
    %v815 = vmul.f32 0.5, %v814
    %v816 = vsub.f32 1.5, %v815
    %v817 = vmul.f32 %v812, %v816
    %vm818 = vweird.f32 %v801
    %vm819 = vweird.f32 %v812
    %vm820 = vmor %vm818, %vm819
    %v821 = vsel %vm820, %v812, %v817
    %v822 = vmul.f32 %v788, %v811
    %v823 = vmul.f32 %v789, %v821
    %v824 = vperm.slane %v778, 0
    %v825 = vmul.f32 %v822, %v824
    %v826 = vmul.f32 %v823, %v824
    %v827 = vperm.slane %v779, 0
    %v828 = vadd.f32 %v825, %v827
    %v829 = vadd.f32 %v826, %v827
    %830 = vst.msk [vmem:[#allocation7] sm:$0xff] %vm52, %v828
    %831 = vst.msk [vmem:[#allocation7 + $0x8] sm:$0xff] %vm52, %v829
    // Predicated region
    $region18: #{self_attn_channel_forward.1} parent=1 // pred_check
      _
    $region19: #{self_attn_channel_forward.1} parent=1 // pred_check_branch
      %833 = sbr.rel (0) target = $region21
    $region20: #{self_attn_channel_forward.1} parent=1 // pred_region
      %835 = vsyncadd [#allocation4], 0
      %s836 = sshll.u32 [#allocation7], 4
      %s837 = int_to_ptr.vmem [resolvable:$true] %s836
      %s838 = sshll.u32 %s2, 4
      %s839 = int_to_ptr.hbm [resolvable:$true] %s838
      %844 = dma.vmem_to_hbm [thread:$0]  %s837, 256, %s839, [#allocation4], 128, 128, 8
    $region21: #{self_attn_channel_forward.1} parent=1 // pred_fallthru
      _
    // Predicated region
    $region22: #{self_attn_channel_forward.1} parent=1 // pred_check
      _
    $region23: #{self_attn_channel_forward.1} parent=1 // pred_check_branch
      %846 = sbr.rel (0) target = $region25
    $region24: #{self_attn_channel_forward.1} parent=1 // pred_region
      %848 = dma.done [#allocation4], 256
    $region25: #{self_attn_channel_forward.1} parent=1 // pred_fallthru
      _
    %849 = vsyncpa [#allocation3], 1
    %850 = vsyncpa [#allocation6], 1
    %851 = vsyncpa [#allocation4], 1

</llo_original>
